<compile_context>
chip_gen: v7x
topology: tpu7x:2x2x1
jax: 0.10.0
libtpu: 0.0.40
codegen_flags: <defaults>
</compile_context>

<pallas_src>
import functools

import numpy as np
import jax
import jax.numpy as jnp
from jax.experimental import pallas as pl
from jax.experimental.pallas import tpu as pltpu

RMS_EPS = 1e-6


# ------------------------------- Pallas kernel -------------------------------
def _lm_head_kernel(x_ref, w_ref, g_ref, tok_ref, xn_scr, max_scr, arg_scr,
                    *, vocab, vocab_tile, rms_eps):
    j = pl.program_id(0)                     # vocab-tile index (reduction axis)

    @pl.when(j == 0)
    def _init():
        # RMSNorm once (f32 math, rsqrt on the EUP), cached as a bf16 operand.
        x = x_ref[...].astype(jnp.float32)                        # (Rp, H)
        var = jnp.mean(x * x, axis=-1, keepdims=True)
        xn = x * jax.lax.rsqrt(var + rms_eps) * g_ref[...]
        xn_scr[...] = xn.astype(jnp.bfloat16)
        max_scr[...] = jnp.full_like(max_scr, -jnp.inf)
        arg_scr[...] = jnp.zeros_like(arg_scr)

    # lm_head matmul for this vocab tile: bf16 x bf16 -> f32 on the MXU.
    logits = jnp.dot(xn_scr[...], w_ref[...],
                     preferred_element_type=jnp.float32)          # (Rp, TV)

    # Mask padded vocab columns so they can never win the argmax.
    col = jax.lax.broadcasted_iota(jnp.int32, logits.shape, 1) + j * vocab_tile
    logits = jnp.where(col < vocab, logits, -jnp.inf)

    # Per-lane running top-1 across vocab tiles (VPU compares only; strict '>'
    # keeps the earlier tile's index on ties -> first-occurrence semantics).
    better = logits > max_scr[...]
    max_scr[...] = jnp.where(better, logits, max_scr[...])
    arg_scr[...] = jnp.where(better, col, arg_scr[...])

    @pl.when(j == pl.num_programs(0) - 1)
    def _finalize():
        # Two cross-lane XLU reductions, done exactly once.
        row_max = jnp.max(max_scr[...], axis=-1, keepdims=True)   # (Rp, 1)
        tok = jnp.min(
            jnp.where(max_scr[...] == row_max, arg_scr[...], jnp.int32(2 ** 30)),
            axis=-1, keepdims=True)                               # (Rp, 1)
        tok_ref[...] = tok


# -------------------------------- JAX wrapper ---------------------------------
def prepare_lm_head_weight(w, vocab_tile=1024):
    """One-time weight prep OUTSIDE jit: bf16 cast + pad vocab to tile multiple."""
    h, v = w.shape
    v_pad = pl.cdiv(v, vocab_tile) * vocab_tile
    w_bf16 = jnp.asarray(w, jnp.bfloat16)
    if v_pad != v:
        w_bf16 = jnp.pad(w_bf16, ((0, 0), (0, v_pad - v)))
    return w_bf16


@functools.partial(jax.jit, static_argnames=("vocab", "vocab_tile"))
def lm_head_forward(hidden_states, norm_weight, lm_head_weight_bf16, *,
                    vocab, vocab_tile=1024):
    """hidden_states: [B, S, H] -> token ids [B, S, 1] (int32)."""
    b, s, h = hidden_states.shape
    r = b * s
    r_pad = pl.cdiv(r, 8) * 8                      # sublane-aligned row count
    x2d = hidden_states.reshape(r, h).astype(jnp.float32)
    if r_pad != r:
        x2d = jnp.pad(x2d, ((0, r_pad - r), (0, 0)))
    gamma = norm_weight.reshape(1, h).astype(jnp.float32)

    h_w, v_pad = lm_head_weight_bf16.shape
    assert h_w == h and v_pad % vocab_tile == 0
    num_vocab_tiles = v_pad // vocab_tile

    # VMEM budget: double-buffered weight tile + resident activations/scratch.
    # (At real sizes: VOCAB_TILE=4096 on v5e/v6e, 2048 on v7x's 64 MiB VMEM.)
    vmem_bytes = (2 * h * vocab_tile * 2           # bf16 weight tile, 2 buffers
                  + r_pad * h * (4 + 2)            # f32 x + bf16 normed copy
                  + r_pad * vocab_tile * (4 + 4)   # running max / argmax
                  + r_pad * 4)
    vmem_limit = int(max(32 * 1024 * 1024, 1.5 * vmem_bytes))

    kernel = functools.partial(_lm_head_kernel, vocab=vocab,
                               vocab_tile=vocab_tile, rms_eps=RMS_EPS)

    tokens = pl.pallas_call(
        kernel,
        out_shape=jax.ShapeDtypeStruct((r_pad, 1), jnp.int32),
        grid_spec=pltpu.PrefetchScalarGridSpec(
            num_scalar_prefetch=0,
            grid=(num_vocab_tiles,),               # weight streamed exactly once
            in_specs=[
                pl.BlockSpec((r_pad, h), lambda j: (0, 0)),          # activations
                pl.BlockSpec((h, vocab_tile), lambda j: (0, j)),     # weight tile
                pl.BlockSpec((1, h), lambda j: (0, 0)),              # norm gain
            ],
            out_specs=pl.BlockSpec((r_pad, 1), lambda j: (0, 0)),
            scratch_shapes=[
                pltpu.VMEM((r_pad, h), jnp.bfloat16),        # cached normed x
                pltpu.VMEM((r_pad, vocab_tile), jnp.float32),  # per-lane max
                pltpu.VMEM((r_pad, vocab_tile), jnp.int32),    # per-lane argmax
            ],
        ),
        compiler_params=pltpu.CompilerParams(
            dimension_semantics=("arbitrary",),
            vmem_limit_bytes=vmem_limit,
        ),
        cost_estimate=pl.CostEstimate(
            flops=2 * r_pad * h * v_pad,
            transcendentals=r_pad,
            bytes_accessed=h * v_pad * 2 + r_pad * h * 4 + h * 4 + r_pad * 4,
        ),
    )(x2d, lm_head_weight_bf16, gamma)

    return tokens[:r].reshape(b, s, 1)


# ------------------------- pure-JAX reference (check) -------------------------
def lm_head_reference(hidden_states, norm_weight, lm_head_weight):
    x = hidden_states.astype(jnp.float32)
    g = norm_weight.astype(jnp.float32)
    var = jnp.mean(x * x, axis=-1, keepdims=True)
    xn = x * jax.lax.rsqrt(var + RMS_EPS) * g
    logits = jnp.dot(xn.astype(jnp.bfloat16),
                     lm_head_weight.astype(jnp.bfloat16),
                     preferred_element_type=jnp.float32)
    # torch.topk(..., 1) indices -> first-occurrence argmax (int32 token ids).
    return jnp.argmax(logits, axis=-1)[..., None].astype(jnp.int32)


# ------------------------------------ main ------------------------------------
if __name__ == "__main__":
    BATCH, SEQ, HIDDEN, VOCAB = 1, 8, 256, 3000   # VOCAB not a tile multiple on
    VOCAB_TILE = 1024                             # purpose: exercises the mask

    key = jax.random.PRNGKey(0)
    k_x, k_g, k_w = jax.random.split(key, 3)

    hidden_states = jax.random.normal(k_x, (BATCH, SEQ, HIDDEN), jnp.float32)
    norm_weight = 1.0 + 0.1 * jax.random.normal(k_g, (HIDDEN,), jnp.float32)
    lm_head_weight = 0.02 * jax.random.normal(k_w, (HIDDEN, VOCAB), jnp.float32)

    # One-time weight prep (bf16 + pad), outside the jitted forward.
    w_prepared = prepare_lm_head_weight(lm_head_weight, vocab_tile=VOCAB_TILE)

    tokens = lm_head_forward(hidden_states, norm_weight, w_prepared,
                             vocab=VOCAB, vocab_tile=VOCAB_TILE)
    jax.block_until_ready(tokens)

    ref = lm_head_reference(hidden_states, norm_weight, lm_head_weight)
    assert tokens.shape == (BATCH, SEQ, 1)
    assert int(tokens.min()) >= 0 and int(tokens.max()) < VOCAB
    np.testing.assert_array_equal(np.asarray(tokens), np.asarray(ref))

    print("KERNEL_OK")
</pallas_src>

<mosaic_0001>
module attributes {stable_mosaic.version = 11 : i64} {
  func.func @_lm_head_kernel(%arg0: i32, %arg1: memref<8x256xf32, #tpu.memory_space<vmem>>, %arg2: memref<256x1024xbf16, #tpu.memory_space<vmem>>, %arg3: memref<1x256xf32, #tpu.memory_space<vmem>>, %arg4: memref<8x1xi32, #tpu.memory_space<vmem>>, %arg5: memref<8x256xbf16, #tpu.memory_space<vmem>>, %arg6: memref<8x1024xf32, #tpu.memory_space<vmem>>, %arg7: memref<8x1024xi32, #tpu.memory_space<vmem>>) attributes {dimension_semantics = [#tpu.dimension_semantics<arbitrary>], iteration_bounds = array<i64: 3>, scalar_prefetch = 0 : i64, scratch_operands = 3 : i64, tpu.core_type = #tpu.core_type<tc>, window_params = [{pipeline_mode = #tpu.pipeline_mode<synchronous>, transform_indices = @transform_0, window_bounds = array<i64: 8, 256>}, {transform_indices = @transform_1, window_bounds = array<i64: 256, 1024>}, {pipeline_mode = #tpu.pipeline_mode<synchronous>, transform_indices = @transform_2, window_bounds = array<i64: 1, 256>}, {pipeline_mode = #tpu.pipeline_mode<synchronous>, transform_indices = @transform_3, window_bounds = array<i64: 8, 1>}]} {
    %c0_i32 = arith.constant 0 : i32
    %0 = arith.cmpi eq, %arg0, %c0_i32 : i32
    %1 = arith.extui %0 : i1 to i32
    %c0_i32_0 = arith.constant 0 : i32
    %2 = arith.cmpi ne, %1, %c0_i32_0 : i32
    scf.if %2 {
      %c0_16 = arith.constant 0 : index
      %c0_17 = arith.constant 0 : index
      %25 = vector.load %arg1[%c0_16, %c0_17] : memref<8x256xf32, #tpu.memory_space<vmem>>, vector<8x256xf32>
      %26 = arith.mulf %25, %25 : vector<8x256xf32>
      %cst_18 = arith.constant dense<0.000000e+00> : vector<8xf32>
      %27 = vector.multi_reduction <add>, %26, %cst_18 [1] : vector<8x256xf32> to vector<8xf32>
      %28 = vector.shape_cast %27 : vector<8xf32> to vector<8x1xf32>
      %cst_19 = arith.constant 2.560000e+02 : f32
      %29 = vector.broadcast %cst_19 : f32 to vector<8x1xf32>
      %30 = arith.divf %28, %29 : vector<8x1xf32>
      %cst_20 = arith.constant 9.99999997E-7 : f32
      %31 = vector.broadcast %cst_20 : f32 to vector<8x1xf32>
      %32 = arith.addf %30, %31 : vector<8x1xf32>
      %33 = math.rsqrt %32 : vector<8x1xf32>
      %34 = vector.broadcast %33 : vector<8x1xf32> to vector<8x256xf32>
      %35 = arith.mulf %25, %34 : vector<8x256xf32>
      %c0_21 = arith.constant 0 : index
      %c0_22 = arith.constant 0 : index
      %36 = vector.load %arg3[%c0_21, %c0_22] : memref<1x256xf32, #tpu.memory_space<vmem>>, vector<1x256xf32>
      %37 = vector.broadcast %36 : vector<1x256xf32> to vector<8x256xf32>
      %38 = arith.mulf %35, %37 : vector<8x256xf32>
      %39 = arith.truncf %38 : vector<8x256xf32> to vector<8x256xbf16>
      %c0_23 = arith.constant 0 : index
      %c0_24 = arith.constant 0 : index
      %40 = vector.load %arg5[%c0_23, %c0_24] : memref<8x256xbf16, #tpu.memory_space<vmem>>, vector<8x256xbf16>
      tpu.vector_store %arg5[%c0_23, %c0_24], %39 {strides = array<i32>} : memref<8x256xbf16, #tpu.memory_space<vmem>>, vector<8x256xbf16>,
      %cst_25 = arith.constant 0xFF800000 : f32
      %41 = vector.broadcast %cst_25 : f32 to vector<8x1024xf32>
      %c0_26 = arith.constant 0 : index
      %c0_27 = arith.constant 0 : index
      %42 = vector.load %arg6[%c0_26, %c0_27] : memref<8x1024xf32, #tpu.memory_space<vmem>>, vector<8x1024xf32>
      tpu.vector_store %arg6[%c0_26, %c0_27], %41 {strides = array<i32>} : memref<8x1024xf32, #tpu.memory_space<vmem>>, vector<8x1024xf32>,
      %c0_i32_28 = arith.constant 0 : i32
      %43 = vector.broadcast %c0_i32_28 : i32 to vector<8x1024xi32>
      %c0_29 = arith.constant 0 : index
      %c0_30 = arith.constant 0 : index
      %44 = vector.load %arg7[%c0_29, %c0_30] : memref<8x1024xi32, #tpu.memory_space<vmem>>, vector<8x1024xi32>
      tpu.vector_store %arg7[%c0_29, %c0_30], %43 {strides = array<i32>} : memref<8x1024xi32, #tpu.memory_space<vmem>>, vector<8x1024xi32>,
    } else {
    }
    %c0 = arith.constant 0 : index
    %c0_1 = arith.constant 0 : index
    %3 = vector.load %arg5[%c0, %c0_1] : memref<8x256xbf16, #tpu.memory_space<vmem>>, vector<8x256xbf16>
    %c0_2 = arith.constant 0 : index
    %c0_3 = arith.constant 0 : index
    %4 = vector.load %arg2[%c0_2, %c0_3] : memref<256x1024xbf16, #tpu.memory_space<vmem>>, vector<256x1024xbf16>
    %cst = arith.constant dense<0.000000e+00> : vector<8x1024xf32>
    %5 = tpu.matmul %3, %4, %cst {dimension_numbers = #tpu.dot_dimension_numbers<[1], [0], [0], [1], [0, 0, 1, 1], [], []>} : vector<8x256xbf16>, vector<256x1024xbf16>, vector<8x1024xf32> -> vector<8x1024xf32>
    %6 = tpu.iota {dimensions = array<i32: 1>} : vector<8x1024xi32>
    %c1024_i32 = arith.constant 1024 : i32
    %7 = arith.muli %arg0, %c1024_i32 : i32
    %8 = vector.broadcast %7 : i32 to vector<8x1024xi32>
    %9 = arith.addi %6, %8 : vector<8x1024xi32>
    %c3000_i32 = arith.constant 3000 : i32
    %10 = vector.broadcast %c3000_i32 : i32 to vector<8x1024xi32>
    %11 = arith.cmpi slt, %9, %10 : vector<8x1024xi32>
    %cst_4 = arith.constant 0xFF800000 : f32
    %12 = vector.broadcast %cst_4 : f32 to vector<8x1024xf32>
    %13 = arith.select %11, %5, %12 : vector<8x1024xi1>, vector<8x1024xf32>
    %c0_5 = arith.constant 0 : index
    %c0_6 = arith.constant 0 : index
    %14 = vector.load %arg6[%c0_5, %c0_6] : memref<8x1024xf32, #tpu.memory_space<vmem>>, vector<8x1024xf32>
    %15 = arith.cmpf ogt, %13, %14 : vector<8x1024xf32>
    %c0_7 = arith.constant 0 : index
    %c0_8 = arith.constant 0 : index
    %16 = vector.load %arg6[%c0_7, %c0_8] : memref<8x1024xf32, #tpu.memory_space<vmem>>, vector<8x1024xf32>
    %17 = arith.select %15, %13, %16 : vector<8x1024xi1>, vector<8x1024xf32>
    %c0_9 = arith.constant 0 : index
    %c0_10 = arith.constant 0 : index
    %18 = vector.load %arg6[%c0_9, %c0_10] : memref<8x1024xf32, #tpu.memory_space<vmem>>, vector<8x1024xf32>
    tpu.vector_store %arg6[%c0_9, %c0_10], %17 {strides = array<i32>} : memref<8x1024xf32, #tpu.memory_space<vmem>>, vector<8x1024xf32>,
    %c0_11 = arith.constant 0 : index
    %c0_12 = arith.constant 0 : index
    %19 = vector.load %arg7[%c0_11, %c0_12] : memref<8x1024xi32, #tpu.memory_space<vmem>>, vector<8x1024xi32>
    %20 = arith.select %15, %9, %19 : vector<8x1024xi1>, vector<8x1024xi32>
    %c0_13 = arith.constant 0 : index
    %c0_14 = arith.constant 0 : index
    %21 = vector.load %arg7[%c0_13, %c0_14] : memref<8x1024xi32, #tpu.memory_space<vmem>>, vector<8x1024xi32>
    tpu.vector_store %arg7[%c0_13, %c0_14], %20 {strides = array<i32>} : memref<8x1024xi32, #tpu.memory_space<vmem>>, vector<8x1024xi32>,
    %c2_i32 = arith.constant 2 : i32
    %22 = arith.cmpi eq, %arg0, %c2_i32 : i32
    %23 = arith.extui %22 : i1 to i32
    %c0_i32_15 = arith.constant 0 : i32
    %24 = arith.cmpi ne, %23, %c0_i32_15 : i32
    scf.if %24 {
      %c0_16 = arith.constant 0 : index
      %c0_17 = arith.constant 0 : index
      %25 = vector.load %arg6[%c0_16, %c0_17] : memref<8x1024xf32, #tpu.memory_space<vmem>>, vector<8x1024xf32>
      %cst_18 = arith.constant dense<0xFF800000> : vector<8xf32>
      %26 = vector.multi_reduction <maximumf>, %25, %cst_18 [1] : vector<8x1024xf32> to vector<8xf32>
      %27 = vector.shape_cast %26 : vector<8xf32> to vector<8x1xf32>
      %c0_19 = arith.constant 0 : index
      %c0_20 = arith.constant 0 : index
      %28 = vector.load %arg6[%c0_19, %c0_20] : memref<8x1024xf32, #tpu.memory_space<vmem>>, vector<8x1024xf32>
      %29 = vector.broadcast %27 : vector<8x1xf32> to vector<8x1024xf32>
      %30 = arith.cmpf oeq, %28, %29 : vector<8x1024xf32>
      %c0_21 = arith.constant 0 : index
      %c0_22 = arith.constant 0 : index
      %31 = vector.load %arg7[%c0_21, %c0_22] : memref<8x1024xi32, #tpu.memory_space<vmem>>, vector<8x1024xi32>
      %c1073741824_i32 = arith.constant 1073741824 : i32
      %32 = vector.broadcast %c1073741824_i32 : i32 to vector<8x1024xi32>
      %33 = arith.select %30, %31, %32 : vector<8x1024xi1>, vector<8x1024xi32>
      %cst_23 = arith.constant dense<2147483647> : vector<8xi32>
      %34 = vector.multi_reduction <minsi>, %33, %cst_23 [1] : vector<8x1024xi32> to vector<8xi32>
      %35 = vector.shape_cast %34 : vector<8xi32> to vector<8x1xi32>
      %c0_24 = arith.constant 0 : index
      %c0_25 = arith.constant 0 : index
      %36 = vector.load %arg4[%c0_24, %c0_25] : memref<8x1xi32, #tpu.memory_space<vmem>>, vector<8x1xi32>
      tpu.vector_store %arg4[%c0_24, %c0_25], %35 {strides = array<i32>} : memref<8x1xi32, #tpu.memory_space<vmem>>, vector<8x1xi32>,
    } else {
    }
    return
  }
  func.func @transform_0(%arg0: i32) -> (i32, i32) {
    %c0_i32 = arith.constant 0 : i32
    %c0_i32_0 = arith.constant 0 : i32
    %c0_i32_1 = arith.constant 0 : i32
    return %c0_i32, %c0_i32_0 : i32, i32
  }
  func.func @transform_1(%arg0: i32) -> (i32, i32) {
    %c0_i32 = arith.constant 0 : i32
    %c0_i32_0 = arith.constant 0 : i32
    return %c0_i32, %arg0 : i32, i32
  }
  func.func @transform_2(%arg0: i32) -> (i32, i32) {
    %c0_i32 = arith.constant 0 : i32
    %c0_i32_0 = arith.constant 0 : i32
    %c0_i32_1 = arith.constant 0 : i32
    return %c0_i32, %c0_i32_0 : i32, i32
  }
  func.func @transform_3(%arg0: i32) -> (i32, i32) {
    %c0_i32 = arith.constant 0 : i32
    %c0_i32_0 = arith.constant 0 : i32
    %c0_i32_1 = arith.constant 0 : i32
    return %c0_i32, %c0_i32_0 : i32, i32
  }
}

</mosaic_0001>

<llo_original>
// kernel: lm_head_forward.1
$region0: #{lm_head_forward.1}
  #allocation0 [shape = 'u32[]', space=smem, size = 0x4, offset = 0x4, fixed_abs, tag = 'smem constant byte address 0x4 - core index']
  #allocation1 [shape = 'u32[144,128]{1,0:T(1,128)}', space=vmem, size = 0x12000, scoped, tag = 'internal scratch']
  #allocation2 [shape = 'bf16[8,256]{1,0:T(8,128)(2,1)}', space=vmem, size = 0x1000, scoped, tag = 'scratch operand']
  #allocation3 [shape = 'f32[8,1024]{1,0:T(8,128)}', space=vmem, size = 0x8000, scoped, tag = 'scratch operand']
  #allocation4 [shape = 's32[8,1024]{1,0:T(8,128)}', space=vmem, size = 0x8000, scoped, tag = 'scratch operand']
  %s0 = inlined_call_operand.hbm [shape: f32[8,256], index: 0, kind: input, shape index: {}]
  %s1 = inlined_call_operand.hbm [shape: bf16[256,3072], index: 1, kind: input, shape index: {}]
  %s2 = inlined_call_operand.hbm [shape: f32[1,256], index: 2, kind: input, shape index: {}]
  %s3 = inlined_call_operand.vmem [shape: s32[8,1], index: 3, kind: output, shape index: {}]
  %s4 = sld [smem:[#allocation0]]
  $region65: #{lm_head_forward.1} parent=0
    _
  %s6 = ssub.s32 1, %s4
  %s7 = scalar_select 0, %s6, %s4
  $region1: #{lm_head_forward.1} parent=0
    #allocation5 [shape = 'u8[8192]{0}', space=vmem, size = 0x2000, scoped, tag = 'input window, operand 0, single buffered']
    #allocation6 [shape = 's32[2]{0}', space=sflag, size = 0x8, scoped, tag = 'scoped memory for lm_head_forward.1']
    #allocation7 [shape = 'u8[1048576]{0}', space=vmem, size = 0x100000, scoped, tag = 'input window, operand 1']
    #allocation8 [shape = 's32[2]{0}', space=sflag, size = 0x8, scoped, tag = 'scoped memory for lm_head_forward.1']
    #allocation9 [shape = 'u8[1024]{0}', space=vmem, size = 0x400, scoped, tag = 'input window, operand 2, single buffered']
    %8 = vsyncpa [#allocation6], 0
    %9 = vsyncpa [#allocation8], 0
    %s10 = scalar_lea.sflag [#allocation8], 1
    %11 = vsyncpa %s10, 0
    loop: start=0, step=1, limit=5
    $region2: #{lm_head_forward.1} parent=1 // loop_pre_header
      _
    $region3: #{lm_head_forward.1} parent=1 // loop_header
      %s13 = sphi 0, %s17
      %p14 = scmp.ge.s32.totalorder %s13, 5
      %s21 = sphi 0, %s21
      %s23 = sphi 0, %s21
      %s24 = sphi 0, %s23
      %s38 = sphi 0, %s24
      %s44 = sphi 0, %s46
      %s47 = sphi 0, %s44
      %s48 = sphi 0, %s47
      %s64 = sphi 0, %s48
      %s68 = sphi 0, %s68
      %s70 = sphi 0, %s68
      %s71 = sphi 0, %s70
      %s85 = sphi 0, %s71
      %s89 = sphi 0, %s89
      %s91 = sphi 0, %s89
      %s92 = sphi 0, %s91
      %s106 = sphi 0, %s92
    $region4: #{lm_head_forward.1} parent=1 // loop_header_branch
      %16 = sbr.rel (%p14) target = $region8
    $region5: #{lm_head_forward.1} parent=1 // loop_body
      %s18 = ssub.s32 %s13, 1
      %s19 = ssub.s32 %s13, 2
      %s20 = sadd.s32 %s13, 1
      %s22 = sadd.s32 %s21, 1
      %p25 = scmp.eq.s32.totalorder %s13, 2
      %p26 = scmp.ne.s32.totalorder %s21, %s23
      %p27 = scmp.eq.s32.totalorder %s13, 0
      %p28 = por %p26, %p27
      %p29 = scmp.ne.s32.totalorder %s21, %s23
      %p30 = scmp.eq.s32.totalorder %s18, 2
      %p31 = por %p29, %p30
      %p32 = scmp.ne.s32.totalorder %s23, %s24
      %p33 = scmp.eq.s32.totalorder %s18, 0
      %p34 = por %p32, %p33
      %p35 = scmp.ne.s32.totalorder %s23, %s24
      %p36 = scmp.eq.s32.totalorder %s19, 2
      %p37 = por %p35, %p36
      %p39 = scmp.ne.s32.totalorder %s24, %s38
      %p40 = scmp.eq.s32.totalorder %s19, 0
      %p41 = por %p39, %p40
      %s42 = ssub.s32 %s13, %s20
      %p43 = scmp.eq.s32.totalorder %s42, 0
      %s45 = sadd.s32 %s44, 1
      %s46 = scalar_select %p43, %s44, %s45
      %p49 = pneg %p43
      %p50 = scmp.eq.s32.totalorder %s13, 2
      %p51 = por %p49, %p50
      %p52 = scmp.ne.s32.totalorder %s44, %s47
      %p53 = scmp.eq.s32.totalorder %s13, 0
      %p54 = por %p52, %p53
      %p55 = scmp.ne.s32.totalorder %s44, %s47
      %p56 = scmp.eq.s32.totalorder %s18, 2
      %p57 = por %p55, %p56
      %p58 = scmp.ne.s32.totalorder %s47, %s48
      %p59 = scmp.eq.s32.totalorder %s18, 0
      %p60 = por %p58, %p59
      %p61 = scmp.ne.s32.totalorder %s47, %s48
      %p62 = scmp.eq.s32.totalorder %s19, 2
      %p63 = por %p61, %p62
      %p65 = scmp.ne.s32.totalorder %s48, %s64
      %p66 = scmp.eq.s32.totalorder %s19, 0
      %p67 = por %p65, %p66
      %s69 = sadd.s32 %s68, 1
      %p72 = scmp.eq.s32.totalorder %s13, 2
      %p73 = scmp.ne.s32.totalorder %s68, %s70
      %p74 = scmp.eq.s32.totalorder %s13, 0
      %p75 = por %p73, %p74
      %p76 = scmp.ne.s32.totalorder %s68, %s70
      %p77 = scmp.eq.s32.totalorder %s18, 2
      %p78 = por %p76, %p77
      %p79 = scmp.ne.s32.totalorder %s70, %s71
      %p80 = scmp.eq.s32.totalorder %s18, 0
      %p81 = por %p79, %p80
      %p82 = scmp.ne.s32.totalorder %s70, %s71
      %p83 = scmp.eq.s32.totalorder %s19, 2
      %p84 = por %p82, %p83
      %p86 = scmp.ne.s32.totalorder %s71, %s85
      %p87 = scmp.eq.s32.totalorder %s19, 0
      %p88 = por %p86, %p87
      %s90 = sadd.s32 %s89, 1
      %p93 = scmp.eq.s32.totalorder %s13, 2
      %p94 = scmp.ne.s32.totalorder %s89, %s91
      %p95 = scmp.eq.s32.totalorder %s13, 0
      %p96 = por %p94, %p95
      %p97 = scmp.ne.s32.totalorder %s89, %s91
      %p98 = scmp.eq.s32.totalorder %s18, 2
      %p99 = por %p97, %p98
      %p100 = scmp.ne.s32.totalorder %s91, %s92
      %p101 = scmp.eq.s32.totalorder %s18, 0
      %p102 = por %p100, %p101
      %p103 = scmp.ne.s32.totalorder %s91, %s92
      %p104 = scmp.eq.s32.totalorder %s19, 2
      %p105 = por %p103, %p104
      %p107 = scmp.ne.s32.totalorder %s92, %s106
      %p108 = scmp.eq.s32.totalorder %s19, 0
      %p109 = por %p107, %p108
      %p110 = scmp.le.s32.totalorder 1, %s13
      %p111 = scmp.lt.s32.totalorder %s13, 4
      %p112 = pnand %p110, %p111
      %p113 = pneg %p112
      // Predicated region
      $region9: #{lm_head_forward.1} parent=5 // pred_check
        _
      $region10: #{lm_head_forward.1} parent=5 // pred_check_branch
        %115 = sbr.rel (%p112) target = $region12
      $region11: #{lm_head_forward.1} parent=5 // pred_region
        %s116 = ssub.s32 %s13, 1
        // Predicated region
        $region13: #{lm_head_forward.1} parent=11 // pred_check
          %p117 = pneg %p34
        $region14: #{lm_head_forward.1} parent=11 // pred_check_branch
          %119 = sbr.rel (%p117) target = $region16
        $region15: #{lm_head_forward.1} parent=11 // pred_region
          %s121 = ssub.s32 256, 256
          %122 = vsyncadd [#allocation6], %s121
          %s124 = sshll.u32 [#allocation5], 4
          %s125 = int_to_ptr.vmem [resolvable:$true] %s124
          %127 = dma.hbm_to_vmem [thread:$0]  %s0, 256, %s125, [#allocation6]
        $region16: #{lm_head_forward.1} parent=11 // pred_fallthru
          _
        // Predicated region
        $region17: #{lm_head_forward.1} parent=11 // pred_check
          %p128 = pneg %p81
        $region18: #{lm_head_forward.1} parent=11 // pred_check_branch
          %130 = sbr.rel (%p128) target = $region20
        $region19: #{lm_head_forward.1} parent=11 // pred_region
          %s132 = ssub.s32 32, 32
          %133 = vsyncadd [#allocation8], %s132
          %s135 = sshll.u32 [#allocation9], 4
          %s136 = int_to_ptr.vmem [resolvable:$true] %s135
          %138 = dma.hbm_to_vmem [thread:$0]  %s2, 32, %s136, [#allocation8]
        $region20: #{lm_head_forward.1} parent=11 // pred_fallthru
          _
      $region12: #{lm_head_forward.1} parent=5 // pred_fallthru
        _
      %p139 = scmp.lt.s32.totalorder %s13, 3
      // Predicated region
      $region21: #{lm_head_forward.1} parent=5 // pred_check
        %p140 = pneg %p139
      $region22: #{lm_head_forward.1} parent=5 // pred_check_branch
        %142 = sbr.rel (%p140) target = $region24
      $region23: #{lm_head_forward.1} parent=5 // pred_region
        // Predicated region
        $region25: #{lm_head_forward.1} parent=23 // pred_check
          %p143 = pneg %p54
        $region26: #{lm_head_forward.1} parent=23 // pred_check_branch
          %145 = sbr.rel (%p143) target = $region28
        $region27: #{lm_head_forward.1} parent=23 // pred_region
          %s146 = sand.u32 %s13, 1
          %s147 = scalar_lea.sflag [#allocation8], %s146
          %s148 = sand.u32 %s44, 1
          %s149 = smul.addr %s148, 1024
          %s150 = scalar_lea.vmem [#allocation7], %s149
          %s151 = smul.u32 8, %s13
          %s153 = ssub.s32 16384, 16384
          %154 = vsyncadd %s147, %s153
          %s155 = smul.addr %s151, 64
          %s156 = scalar_lea.hbm %s1, %s155
          %s157 = sshll.u32 %s150, 4
          %s158 = int_to_ptr.vmem [resolvable:$true] %s157
          %163 = dma.hbm_to_vmem [thread:$0]  %s156, 16384, %s158, %s147, 1536, 512, 32
        $region28: #{lm_head_forward.1} parent=23 // pred_fallthru
          _
      $region24: #{lm_head_forward.1} parent=5 // pred_fallthru
        _
      %p164 = scmp.le.s32.totalorder 1, %s13
      %p165 = scmp.lt.s32.totalorder %s13, 4
      %p166 = pnand %p164, %p165
      %p167 = pneg %p166
      // Predicated region
      $region29: #{lm_head_forward.1} parent=5 // pred_check
        _
      $region30: #{lm_head_forward.1} parent=5 // pred_check_branch
        %169 = sbr.rel (%p166) target = $region32
      $region31: #{lm_head_forward.1} parent=5 // pred_region
        %s170 = ssub.s32 %s13, 1
        // Predicated region
        $region33: #{lm_head_forward.1} parent=31 // pred_check
          %p171 = pneg %p34
        $region34: #{lm_head_forward.1} parent=31 // pred_check_branch
          %173 = sbr.rel (%p171) target = $region36
        $region35: #{lm_head_forward.1} parent=31 // pred_region
          %174 = dma.done [#allocation6], 256
        $region36: #{lm_head_forward.1} parent=31 // pred_fallthru
          _
        %s175 = sand.u32 %s18, 1
        %s176 = scalar_lea.sflag [#allocation8], %s175
        %s177 = sand.u32 %s47, 1
        %s178 = smul.addr %s177, 1024
        %s179 = scalar_lea.vmem [#allocation7], %s178
        // Predicated region
        $region37: #{lm_head_forward.1} parent=31 // pred_check
          %p180 = pneg %p60
        $region38: #{lm_head_forward.1} parent=31 // pred_check_branch
          %182 = sbr.rel (%p180) target = $region40
        $region39: #{lm_head_forward.1} parent=31 // pred_region
          %183 = dma.done %s176, 16384
        $region40: #{lm_head_forward.1} parent=31 // pred_fallthru
          _
        // Predicated region
        $region41: #{lm_head_forward.1} parent=31 // pred_check
          %p184 = pneg %p81
        $region42: #{lm_head_forward.1} parent=31 // pred_check_branch
          %186 = sbr.rel (%p184) target = $region44
        $region43: #{lm_head_forward.1} parent=31 // pred_region
          %187 = dma.done [#allocation8], 32
        $region44: #{lm_head_forward.1} parent=31 // pred_fallthru
          _
        %p188 = pneg %p34
        %p189 = pneg %p31
        %s190 = sand.u32 %s18, 1
        %s191 = scalar_lea.sflag [#allocation8], %s190
        %s192 = sand.u32 %s47, 1
        %s193 = smul.addr %s192, 1024
        %s194 = scalar_lea.vmem [#allocation7], %s193
        %p195 = pneg %p60
        %p196 = pneg %p57
        %p197 = pneg %p81
        %p198 = pneg %p78
        %p199 = pneg %p102
        %p200 = pneg %p99
        %s201 = smul.u32 8, %s18
        %p202 = scmp.eq.s32.totalorder %s18, 0
        // Predicated region
        $region45: #{lm_head_forward.1} parent=31 // pred_check
          %p203 = pneg %p202
        $region46: #{lm_head_forward.1} parent=31 // pred_check_branch
          %205 = sbr.rel (%p203) target = $region48
        $region47: #{lm_head_forward.1} parent=31 // pred_region
          %v206 = vld [vmem:[#allocation5] sm:$0xff]
          %v207 = vld [vmem:[#allocation5 + $0x8] sm:$0xff]
          %v208 = vmul.f32 %v206, %v206
          %v209 = vmul.f32 %v207, %v207
          %v210 = vadd.f32 %v208, %v209
          %211 = vadd.xlane.f32.xlu0 %v210
          %v212 = vpop.xlane.xlu0 %211
          %v213 = vrcp.pop 256.0
          %v214 = vmul.f32 %v212, %v213
          %v215 = vadd.f32 %v214, 1e-06
          %v216 = vrsqrt.pop %v215
          %v217 = vmul.f32 %v206, %v216
          %v218 = vmul.f32 %v207, %v216
          %v219 = vld [vmem:[#allocation9] sm:$0x3]
          %v221 = vlaneseq
          %v222 = vshrl.u32 %v221, 7
          %v223 = vsub.s32 0, %v222
          %v224 = vrot.slane %v219, %v223
          %v225 = vlaneseq
          %v226 = vshrl.u32 %v225, 7
          %v227 = vsub.s32 1, %v226
          %v228 = vrot.slane %v219, %v227
          %v231 = vmul.f32 %v217, %v224
          %v232 = vmul.f32 %v218, %v228
          %v233 = vpack.c.bf16 %v231, %v231
          %v234 = vpack.c.bf16 %v232, %v232
          %v237 = vunpack.c.l.b16 %v233
          %v238 = vunpack.c.l.b16 %v234
          %v239 = vpack.c.b16 %v238, %v237
          %241 = vst [vmem:[#allocation2] sm:$0xff] %v239
          %242 = vst [vmem:[#allocation3] sm:$0xff] -inf
          %243 = vst [vmem:[#allocation3 + $0x8] sm:$0xff] -inf
          %244 = vst [vmem:[#allocation3 + $0x10] sm:$0xff] -inf
          %245 = vst [vmem:[#allocation3 + $0x18] sm:$0xff] -inf
          %246 = vst [vmem:[#allocation3 + $0x20] sm:$0xff] -inf
          %247 = vst [vmem:[#allocation3 + $0x28] sm:$0xff] -inf
          %248 = vst [vmem:[#allocation3 + $0x30] sm:$0xff] -inf
          %249 = vst [vmem:[#allocation3 + $0x38] sm:$0xff] -inf
          %250 = vst [vmem:[#allocation4] sm:$0xff] 0
          %251 = vst [vmem:[#allocation4 + $0x8] sm:$0xff] 0
          %252 = vst [vmem:[#allocation4 + $0x10] sm:$0xff] 0
          %253 = vst [vmem:[#allocation4 + $0x18] sm:$0xff] 0
          %254 = vst [vmem:[#allocation4 + $0x20] sm:$0xff] 0
          %255 = vst [vmem:[#allocation4 + $0x28] sm:$0xff] 0
          %256 = vst [vmem:[#allocation4 + $0x30] sm:$0xff] 0
          %257 = vst [vmem:[#allocation4 + $0x38] sm:$0xff] 0
        $region48: #{lm_head_forward.1} parent=31 // pred_fallthru
          _
        %v258 = vld [vmem:[#allocation2] sm:$0xff]
        %v259 = vld [vmem:[%s179] sm:$0xff]
        %v260 = vld [vmem:[%s179 + $0x8] sm:$0xff]
        %v261 = vld [vmem:[%s179 + $0x10] sm:$0xff]
        %v262 = vld [vmem:[%s179 + $0x18] sm:$0xff]
        %v263 = vld [vmem:[%s179 + $0x20] sm:$0xff]
        %v264 = vld [vmem:[%s179 + $0x28] sm:$0xff]
        %v265 = vld [vmem:[%s179 + $0x30] sm:$0xff]
        %v266 = vld [vmem:[%s179 + $0x38] sm:$0xff]
        %v267 = vld [vmem:[%s179 + $0x40] sm:$0xff]
        %v268 = vld [vmem:[%s179 + $0x48] sm:$0xff]
        %v269 = vld [vmem:[%s179 + $0x50] sm:$0xff]
        %v270 = vld [vmem:[%s179 + $0x58] sm:$0xff]
        %v271 = vld [vmem:[%s179 + $0x60] sm:$0xff]
        %v272 = vld [vmem:[%s179 + $0x68] sm:$0xff]
        %v273 = vld [vmem:[%s179 + $0x70] sm:$0xff]
        %v274 = vld [vmem:[%s179 + $0x78] sm:$0xff]
        %v275 = vld [vmem:[%s179 + $0x80] sm:$0xff]
        %v276 = vld [vmem:[%s179 + $0x88] sm:$0xff]
        %v277 = vld [vmem:[%s179 + $0x90] sm:$0xff]
        %v278 = vld [vmem:[%s179 + $0x98] sm:$0xff]
        %v279 = vld [vmem:[%s179 + $0xa0] sm:$0xff]
        %v280 = vld [vmem:[%s179 + $0xa8] sm:$0xff]
        %v281 = vld [vmem:[%s179 + $0xb0] sm:$0xff]
        %v282 = vld [vmem:[%s179 + $0xb8] sm:$0xff]
        %v283 = vld [vmem:[%s179 + $0xc0] sm:$0xff]
        %v284 = vld [vmem:[%s179 + $0xc8] sm:$0xff]
        %v285 = vld [vmem:[%s179 + $0xd0] sm:$0xff]
        %v286 = vld [vmem:[%s179 + $0xd8] sm:$0xff]
        %v287 = vld [vmem:[%s179 + $0xe0] sm:$0xff]
        %v288 = vld [vmem:[%s179 + $0xe8] sm:$0xff]
        %v289 = vld [vmem:[%s179 + $0xf0] sm:$0xff]
        %v290 = vld [vmem:[%s179 + $0xf8] sm:$0xff]
        %v291 = vld [vmem:[%s179 + $0x100] sm:$0xff]
        %v292 = vld [vmem:[%s179 + $0x108] sm:$0xff]
        %v293 = vld [vmem:[%s179 + $0x110] sm:$0xff]
        %v294 = vld [vmem:[%s179 + $0x118] sm:$0xff]
        %v295 = vld [vmem:[%s179 + $0x120] sm:$0xff]
        %v296 = vld [vmem:[%s179 + $0x128] sm:$0xff]
        %v297 = vld [vmem:[%s179 + $0x130] sm:$0xff]
        %v298 = vld [vmem:[%s179 + $0x138] sm:$0xff]
        %v299 = vld [vmem:[%s179 + $0x140] sm:$0xff]
        %v300 = vld [vmem:[%s179 + $0x148] sm:$0xff]
        %v301 = vld [vmem:[%s179 + $0x150] sm:$0xff]
        %v302 = vld [vmem:[%s179 + $0x158] sm:$0xff]
        %v303 = vld [vmem:[%s179 + $0x160] sm:$0xff]
        %v304 = vld [vmem:[%s179 + $0x168] sm:$0xff]
        %v305 = vld [vmem:[%s179 + $0x170] sm:$0xff]
        %v306 = vld [vmem:[%s179 + $0x178] sm:$0xff]
        %v307 = vld [vmem:[%s179 + $0x180] sm:$0xff]
        %v308 = vld [vmem:[%s179 + $0x188] sm:$0xff]
        %v309 = vld [vmem:[%s179 + $0x190] sm:$0xff]
        %v310 = vld [vmem:[%s179 + $0x198] sm:$0xff]
        %v311 = vld [vmem:[%s179 + $0x1a0] sm:$0xff]
        %v312 = vld [vmem:[%s179 + $0x1a8] sm:$0xff]
        %v313 = vld [vmem:[%s179 + $0x1b0] sm:$0xff]
        %v314 = vld [vmem:[%s179 + $0x1b8] sm:$0xff]
        %v315 = vld [vmem:[%s179 + $0x1c0] sm:$0xff]
        %v316 = vld [vmem:[%s179 + $0x1c8] sm:$0xff]
        %v317 = vld [vmem:[%s179 + $0x1d0] sm:$0xff]
        %v318 = vld [vmem:[%s179 + $0x1d8] sm:$0xff]
        %v319 = vld [vmem:[%s179 + $0x1e0] sm:$0xff]
        %v320 = vld [vmem:[%s179 + $0x1e8] sm:$0xff]
        %v321 = vld [vmem:[%s179 + $0x1f0] sm:$0xff]
        %v322 = vld [vmem:[%s179 + $0x1f8] sm:$0xff]
        %v323 = vld [vmem:[%s179 + $0x200] sm:$0xff]
        %v324 = vld [vmem:[%s179 + $0x208] sm:$0xff]
        %v325 = vld [vmem:[%s179 + $0x210] sm:$0xff]
        %v326 = vld [vmem:[%s179 + $0x218] sm:$0xff]
        %v327 = vld [vmem:[%s179 + $0x220] sm:$0xff]
        %v328 = vld [vmem:[%s179 + $0x228] sm:$0xff]
        %v329 = vld [vmem:[%s179 + $0x230] sm:$0xff]
        %v330 = vld [vmem:[%s179 + $0x238] sm:$0xff]
        %v331 = vld [vmem:[%s179 + $0x240] sm:$0xff]
        %v332 = vld [vmem:[%s179 + $0x248] sm:$0xff]
        %v333 = vld [vmem:[%s179 + $0x250] sm:$0xff]
        %v334 = vld [vmem:[%s179 + $0x258] sm:$0xff]
        %v335 = vld [vmem:[%s179 + $0x260] sm:$0xff]
        %v336 = vld [vmem:[%s179 + $0x268] sm:$0xff]
        %v337 = vld [vmem:[%s179 + $0x270] sm:$0xff]
        %v338 = vld [vmem:[%s179 + $0x278] sm:$0xff]
        %v339 = vld [vmem:[%s179 + $0x280] sm:$0xff]
        %v340 = vld [vmem:[%s179 + $0x288] sm:$0xff]
        %v341 = vld [vmem:[%s179 + $0x290] sm:$0xff]
        %v342 = vld [vmem:[%s179 + $0x298] sm:$0xff]
        %v343 = vld [vmem:[%s179 + $0x2a0] sm:$0xff]
        %v344 = vld [vmem:[%s179 + $0x2a8] sm:$0xff]
        %v345 = vld [vmem:[%s179 + $0x2b0] sm:$0xff]
        %v346 = vld [vmem:[%s179 + $0x2b8] sm:$0xff]
        %v347 = vld [vmem:[%s179 + $0x2c0] sm:$0xff]
        %v348 = vld [vmem:[%s179 + $0x2c8] sm:$0xff]
        %v349 = vld [vmem:[%s179 + $0x2d0] sm:$0xff]
        %v350 = vld [vmem:[%s179 + $0x2d8] sm:$0xff]
        %v351 = vld [vmem:[%s179 + $0x2e0] sm:$0xff]
        %v352 = vld [vmem:[%s179 + $0x2e8] sm:$0xff]
        %v353 = vld [vmem:[%s179 + $0x2f0] sm:$0xff]
        %v354 = vld [vmem:[%s179 + $0x2f8] sm:$0xff]
        %v355 = vld [vmem:[%s179 + $0x300] sm:$0xff]
        %v356 = vld [vmem:[%s179 + $0x308] sm:$0xff]
        %v357 = vld [vmem:[%s179 + $0x310] sm:$0xff]
        %v358 = vld [vmem:[%s179 + $0x318] sm:$0xff]
        %v359 = vld [vmem:[%s179 + $0x320] sm:$0xff]
        %v360 = vld [vmem:[%s179 + $0x328] sm:$0xff]
        %v361 = vld [vmem:[%s179 + $0x330] sm:$0xff]
        %v362 = vld [vmem:[%s179 + $0x338] sm:$0xff]
        %v363 = vld [vmem:[%s179 + $0x340] sm:$0xff]
        %v364 = vld [vmem:[%s179 + $0x348] sm:$0xff]
        %v365 = vld [vmem:[%s179 + $0x350] sm:$0xff]
        %v366 = vld [vmem:[%s179 + $0x358] sm:$0xff]
        %v367 = vld [vmem:[%s179 + $0x360] sm:$0xff]
        %v368 = vld [vmem:[%s179 + $0x368] sm:$0xff]
        %v369 = vld [vmem:[%s179 + $0x370] sm:$0xff]
        %v370 = vld [vmem:[%s179 + $0x378] sm:$0xff]
        %v371 = vld [vmem:[%s179 + $0x380] sm:$0xff]
        %v372 = vld [vmem:[%s179 + $0x388] sm:$0xff]
        %v373 = vld [vmem:[%s179 + $0x390] sm:$0xff]
        %v374 = vld [vmem:[%s179 + $0x398] sm:$0xff]
        %v375 = vld [vmem:[%s179 + $0x3a0] sm:$0xff]
        %v376 = vld [vmem:[%s179 + $0x3a8] sm:$0xff]
        %v377 = vld [vmem:[%s179 + $0x3b0] sm:$0xff]
        %v378 = vld [vmem:[%s179 + $0x3b8] sm:$0xff]
        %v379 = vld [vmem:[%s179 + $0x3c0] sm:$0xff]
        %v380 = vld [vmem:[%s179 + $0x3c8] sm:$0xff]
        %v381 = vld [vmem:[%s179 + $0x3d0] sm:$0xff]
        %v382 = vld [vmem:[%s179 + $0x3d8] sm:$0xff]
        %v383 = vld [vmem:[%s179 + $0x3e0] sm:$0xff]
        %v384 = vld [vmem:[%s179 + $0x3e8] sm:$0xff]
        %v385 = vld [vmem:[%s179 + $0x3f0] sm:$0xff]
        %v386 = vld [vmem:[%s179 + $0x3f8] sm:$0xff]
        %v388 = vunpack.c.l.b16 %v258
        %v389 = vunpack.c.h.b16 %v258
        %v390 = vpack.c.b16 %v388, %v388
        %v391 = vpack.c.b16 %v389, %v389
        %v522 = vunpack.c.l.b16 %v259
        %v523 = vunpack.c.h.b16 %v259
        %v524 = vunpack.c.l.b16 %v260
        %v525 = vunpack.c.h.b16 %v260
        %v526 = vunpack.c.l.b16 %v261
        %v527 = vunpack.c.h.b16 %v261
        %v528 = vunpack.c.l.b16 %v262
        %v529 = vunpack.c.h.b16 %v262
        %v530 = vunpack.c.l.b16 %v263
        %v531 = vunpack.c.h.b16 %v263
        %v532 = vunpack.c.l.b16 %v264
        %v533 = vunpack.c.h.b16 %v264
        %v534 = vunpack.c.l.b16 %v265
        %v535 = vunpack.c.h.b16 %v265
        %v536 = vunpack.c.l.b16 %v266
        %v537 = vunpack.c.h.b16 %v266
        %v538 = vunpack.c.l.b16 %v267
        %v539 = vunpack.c.h.b16 %v267
        %v540 = vunpack.c.l.b16 %v268
        %v541 = vunpack.c.h.b16 %v268
        %v542 = vunpack.c.l.b16 %v269
        %v543 = vunpack.c.h.b16 %v269
        %v544 = vunpack.c.l.b16 %v270
        %v545 = vunpack.c.h.b16 %v270
        %v546 = vunpack.c.l.b16 %v271
        %v547 = vunpack.c.h.b16 %v271
        %v548 = vunpack.c.l.b16 %v272
        %v549 = vunpack.c.h.b16 %v272
        %v550 = vunpack.c.l.b16 %v273
        %v551 = vunpack.c.h.b16 %v273
        %v552 = vunpack.c.l.b16 %v274
        %v553 = vunpack.c.h.b16 %v274
        %v554 = vunpack.c.l.b16 %v275
        %v555 = vunpack.c.h.b16 %v275
        %v556 = vunpack.c.l.b16 %v276
        %v557 = vunpack.c.h.b16 %v276
        %v558 = vunpack.c.l.b16 %v277
        %v559 = vunpack.c.h.b16 %v277
        %v560 = vunpack.c.l.b16 %v278
        %v561 = vunpack.c.h.b16 %v278
        %v562 = vunpack.c.l.b16 %v279
        %v563 = vunpack.c.h.b16 %v279
        %v564 = vunpack.c.l.b16 %v280
        %v565 = vunpack.c.h.b16 %v280
        %v566 = vunpack.c.l.b16 %v281
        %v567 = vunpack.c.h.b16 %v281
        %v568 = vunpack.c.l.b16 %v282
        %v569 = vunpack.c.h.b16 %v282
        %v570 = vunpack.c.l.b16 %v283
        %v571 = vunpack.c.h.b16 %v283
        %v572 = vunpack.c.l.b16 %v284
        %v573 = vunpack.c.h.b16 %v284
        %v574 = vunpack.c.l.b16 %v285
        %v575 = vunpack.c.h.b16 %v285
        %v576 = vunpack.c.l.b16 %v286
        %v577 = vunpack.c.h.b16 %v286
        %v578 = vunpack.c.l.b16 %v287
        %v579 = vunpack.c.h.b16 %v287
        %v580 = vunpack.c.l.b16 %v288
        %v581 = vunpack.c.h.b16 %v288
        %v582 = vunpack.c.l.b16 %v289
        %v583 = vunpack.c.h.b16 %v289
        %v584 = vunpack.c.l.b16 %v290
        %v585 = vunpack.c.h.b16 %v290
        %v586 = vunpack.c.l.b16 %v291
        %v587 = vunpack.c.h.b16 %v291
        %v588 = vunpack.c.l.b16 %v292
        %v589 = vunpack.c.h.b16 %v292
        %v590 = vunpack.c.l.b16 %v293
        %v591 = vunpack.c.h.b16 %v293
        %v592 = vunpack.c.l.b16 %v294
        %v593 = vunpack.c.h.b16 %v294
        %v594 = vunpack.c.l.b16 %v295
        %v595 = vunpack.c.h.b16 %v295
        %v596 = vunpack.c.l.b16 %v296
        %v597 = vunpack.c.h.b16 %v296
        %v598 = vunpack.c.l.b16 %v297
        %v599 = vunpack.c.h.b16 %v297
        %v600 = vunpack.c.l.b16 %v298
        %v601 = vunpack.c.h.b16 %v298
        %v602 = vunpack.c.l.b16 %v299
        %v603 = vunpack.c.h.b16 %v299
        %v604 = vunpack.c.l.b16 %v300
        %v605 = vunpack.c.h.b16 %v300
        %v606 = vunpack.c.l.b16 %v301
        %v607 = vunpack.c.h.b16 %v301
        %v608 = vunpack.c.l.b16 %v302
        %v609 = vunpack.c.h.b16 %v302
        %v610 = vunpack.c.l.b16 %v303
        %v611 = vunpack.c.h.b16 %v303
        %v612 = vunpack.c.l.b16 %v304
        %v613 = vunpack.c.h.b16 %v304
        %v614 = vunpack.c.l.b16 %v305
        %v615 = vunpack.c.h.b16 %v305
        %v616 = vunpack.c.l.b16 %v306
        %v617 = vunpack.c.h.b16 %v306
        %v618 = vunpack.c.l.b16 %v307
        %v619 = vunpack.c.h.b16 %v307
        %v620 = vunpack.c.l.b16 %v308
        %v621 = vunpack.c.h.b16 %v308
        %v622 = vunpack.c.l.b16 %v309
        %v623 = vunpack.c.h.b16 %v309
        %v624 = vunpack.c.l.b16 %v310
        %v625 = vunpack.c.h.b16 %v310
        %v626 = vunpack.c.l.b16 %v311
        %v627 = vunpack.c.h.b16 %v311
        %v628 = vunpack.c.l.b16 %v312
        %v629 = vunpack.c.h.b16 %v312
        %v630 = vunpack.c.l.b16 %v313
        %v631 = vunpack.c.h.b16 %v313
        %v632 = vunpack.c.l.b16 %v314
        %v633 = vunpack.c.h.b16 %v314
        %v634 = vunpack.c.l.b16 %v315
        %v635 = vunpack.c.h.b16 %v315
        %v636 = vunpack.c.l.b16 %v316
        %v637 = vunpack.c.h.b16 %v316
        %v638 = vunpack.c.l.b16 %v317
        %v639 = vunpack.c.h.b16 %v317
        %v640 = vunpack.c.l.b16 %v318
        %v641 = vunpack.c.h.b16 %v318
        %v642 = vunpack.c.l.b16 %v319
        %v643 = vunpack.c.h.b16 %v319
        %v644 = vunpack.c.l.b16 %v320
        %v645 = vunpack.c.h.b16 %v320
        %v646 = vunpack.c.l.b16 %v321
        %v647 = vunpack.c.h.b16 %v321
        %v648 = vunpack.c.l.b16 %v322
        %v649 = vunpack.c.h.b16 %v322
        %v650 = vunpack.c.l.b16 %v323
        %v651 = vunpack.c.h.b16 %v323
        %v652 = vunpack.c.l.b16 %v324
        %v653 = vunpack.c.h.b16 %v324
        %v654 = vunpack.c.l.b16 %v325
        %v655 = vunpack.c.h.b16 %v325
        %v656 = vunpack.c.l.b16 %v326
        %v657 = vunpack.c.h.b16 %v326
        %v658 = vunpack.c.l.b16 %v327
        %v659 = vunpack.c.h.b16 %v327
        %v660 = vunpack.c.l.b16 %v328
        %v661 = vunpack.c.h.b16 %v328
        %v662 = vunpack.c.l.b16 %v329
        %v663 = vunpack.c.h.b16 %v329
        %v664 = vunpack.c.l.b16 %v330
        %v665 = vunpack.c.h.b16 %v330
        %v666 = vunpack.c.l.b16 %v331
        %v667 = vunpack.c.h.b16 %v331
        %v668 = vunpack.c.l.b16 %v332
        %v669 = vunpack.c.h.b16 %v332
        %v670 = vunpack.c.l.b16 %v333
        %v671 = vunpack.c.h.b16 %v333
        %v672 = vunpack.c.l.b16 %v334
        %v673 = vunpack.c.h.b16 %v334
        %v674 = vunpack.c.l.b16 %v335
        %v675 = vunpack.c.h.b16 %v335
        %v676 = vunpack.c.l.b16 %v336
        %v677 = vunpack.c.h.b16 %v336
        %v678 = vunpack.c.l.b16 %v337
        %v679 = vunpack.c.h.b16 %v337
        %v680 = vunpack.c.l.b16 %v338
        %v681 = vunpack.c.h.b16 %v338
        %v682 = vunpack.c.l.b16 %v339
        %v683 = vunpack.c.h.b16 %v339
        %v684 = vunpack.c.l.b16 %v340
        %v685 = vunpack.c.h.b16 %v340
        %v686 = vunpack.c.l.b16 %v341
        %v687 = vunpack.c.h.b16 %v341
        %v688 = vunpack.c.l.b16 %v342
        %v689 = vunpack.c.h.b16 %v342
        %v690 = vunpack.c.l.b16 %v343
        %v691 = vunpack.c.h.b16 %v343
        %v692 = vunpack.c.l.b16 %v344
        %v693 = vunpack.c.h.b16 %v344
        %v694 = vunpack.c.l.b16 %v345
        %v695 = vunpack.c.h.b16 %v345
        %v696 = vunpack.c.l.b16 %v346
        %v697 = vunpack.c.h.b16 %v346
        %v698 = vunpack.c.l.b16 %v347
        %v699 = vunpack.c.h.b16 %v347
        %v700 = vunpack.c.l.b16 %v348
        %v701 = vunpack.c.h.b16 %v348
        %v702 = vunpack.c.l.b16 %v349
        %v703 = vunpack.c.h.b16 %v349
        %v704 = vunpack.c.l.b16 %v350
        %v705 = vunpack.c.h.b16 %v350
        %v706 = vunpack.c.l.b16 %v351
        %v707 = vunpack.c.h.b16 %v351
        %v708 = vunpack.c.l.b16 %v352
        %v709 = vunpack.c.h.b16 %v352
        %v710 = vunpack.c.l.b16 %v353
        %v711 = vunpack.c.h.b16 %v353
        %v712 = vunpack.c.l.b16 %v354
        %v713 = vunpack.c.h.b16 %v354
        %v714 = vunpack.c.l.b16 %v355
        %v715 = vunpack.c.h.b16 %v355
        %v716 = vunpack.c.l.b16 %v356
        %v717 = vunpack.c.h.b16 %v356
        %v718 = vunpack.c.l.b16 %v357
        %v719 = vunpack.c.h.b16 %v357
        %v720 = vunpack.c.l.b16 %v358
        %v721 = vunpack.c.h.b16 %v358
        %v722 = vunpack.c.l.b16 %v359
        %v723 = vunpack.c.h.b16 %v359
        %v724 = vunpack.c.l.b16 %v360
        %v725 = vunpack.c.h.b16 %v360
        %v726 = vunpack.c.l.b16 %v361
        %v727 = vunpack.c.h.b16 %v361
        %v728 = vunpack.c.l.b16 %v362
        %v729 = vunpack.c.h.b16 %v362
        %v730 = vunpack.c.l.b16 %v363
        %v731 = vunpack.c.h.b16 %v363
        %v732 = vunpack.c.l.b16 %v364
        %v733 = vunpack.c.h.b16 %v364
        %v734 = vunpack.c.l.b16 %v365
        %v735 = vunpack.c.h.b16 %v365
        %v736 = vunpack.c.l.b16 %v366
        %v737 = vunpack.c.h.b16 %v366
        %v738 = vunpack.c.l.b16 %v367
        %v739 = vunpack.c.h.b16 %v367
        %v740 = vunpack.c.l.b16 %v368
        %v741 = vunpack.c.h.b16 %v368
        %v742 = vunpack.c.l.b16 %v369
        %v743 = vunpack.c.h.b16 %v369
        %v744 = vunpack.c.l.b16 %v370
        %v745 = vunpack.c.h.b16 %v370
        %v746 = vunpack.c.l.b16 %v371
        %v747 = vunpack.c.h.b16 %v371
        %v748 = vunpack.c.l.b16 %v372
        %v749 = vunpack.c.h.b16 %v372
        %v750 = vunpack.c.l.b16 %v373
        %v751 = vunpack.c.h.b16 %v373
        %v752 = vunpack.c.l.b16 %v374
        %v753 = vunpack.c.h.b16 %v374
        %v754 = vunpack.c.l.b16 %v375
        %v755 = vunpack.c.h.b16 %v375
        %v756 = vunpack.c.l.b16 %v376
        %v757 = vunpack.c.h.b16 %v376
        %v758 = vunpack.c.l.b16 %v377
        %v759 = vunpack.c.h.b16 %v377
        %v760 = vunpack.c.l.b16 %v378
        %v761 = vunpack.c.h.b16 %v378
        %v762 = vunpack.c.l.b16 %v379
        %v763 = vunpack.c.h.b16 %v379
        %v764 = vunpack.c.l.b16 %v380
        %v765 = vunpack.c.h.b16 %v380
        %v766 = vunpack.c.l.b16 %v381
        %v767 = vunpack.c.h.b16 %v381
        %v768 = vunpack.c.l.b16 %v382
        %v769 = vunpack.c.h.b16 %v382
        %v770 = vunpack.c.l.b16 %v383
        %v771 = vunpack.c.h.b16 %v383
        %v772 = vunpack.c.l.b16 %v384
        %v773 = vunpack.c.h.b16 %v384
        %v774 = vunpack.c.l.b16 %v385
        %v775 = vunpack.c.h.b16 %v385
        %v776 = vunpack.c.l.b16 %v386
        %v777 = vunpack.c.h.b16 %v386
        %v778 = vpack.c.b16 %v530, %v522
        %v779 = vpack.c.b16 %v531, %v523
        %v780 = vpack.c.b16 %v532, %v524
        %v781 = vpack.c.b16 %v533, %v525
        %v782 = vpack.c.b16 %v534, %v526
        %v783 = vpack.c.b16 %v535, %v527
        %v784 = vpack.c.b16 %v536, %v528
        %v785 = vpack.c.b16 %v537, %v529
        %v786 = vpack.c.b16 %v546, %v538
        %v787 = vpack.c.b16 %v547, %v539
        %v788 = vpack.c.b16 %v548, %v540
        %v789 = vpack.c.b16 %v549, %v541
        %v790 = vpack.c.b16 %v550, %v542
        %v791 = vpack.c.b16 %v551, %v543
        %v792 = vpack.c.b16 %v552, %v544
        %v793 = vpack.c.b16 %v553, %v545
        %v794 = vpack.c.b16 %v562, %v554
        %v795 = vpack.c.b16 %v563, %v555
        %v796 = vpack.c.b16 %v564, %v556
        %v797 = vpack.c.b16 %v565, %v557
        %v798 = vpack.c.b16 %v566, %v558
        %v799 = vpack.c.b16 %v567, %v559
        %v800 = vpack.c.b16 %v568, %v560
        %v801 = vpack.c.b16 %v569, %v561
        %v802 = vpack.c.b16 %v578, %v570
        %v803 = vpack.c.b16 %v579, %v571
        %v804 = vpack.c.b16 %v580, %v572
        %v805 = vpack.c.b16 %v581, %v573
        %v806 = vpack.c.b16 %v582, %v574
        %v807 = vpack.c.b16 %v583, %v575
        %v808 = vpack.c.b16 %v584, %v576
        %v809 = vpack.c.b16 %v585, %v577
        %v810 = vpack.c.b16 %v594, %v586
        %v811 = vpack.c.b16 %v595, %v587
        %v812 = vpack.c.b16 %v596, %v588
        %v813 = vpack.c.b16 %v597, %v589
        %v814 = vpack.c.b16 %v598, %v590
        %v815 = vpack.c.b16 %v599, %v591
        %v816 = vpack.c.b16 %v600, %v592
        %v817 = vpack.c.b16 %v601, %v593
        %v818 = vpack.c.b16 %v610, %v602
        %v819 = vpack.c.b16 %v611, %v603
        %v820 = vpack.c.b16 %v612, %v604
        %v821 = vpack.c.b16 %v613, %v605
        %v822 = vpack.c.b16 %v614, %v606
        %v823 = vpack.c.b16 %v615, %v607
        %v824 = vpack.c.b16 %v616, %v608
        %v825 = vpack.c.b16 %v617, %v609
        %v826 = vpack.c.b16 %v626, %v618
        %v827 = vpack.c.b16 %v627, %v619
        %v828 = vpack.c.b16 %v628, %v620
        %v829 = vpack.c.b16 %v629, %v621
        %v830 = vpack.c.b16 %v630, %v622
        %v831 = vpack.c.b16 %v631, %v623
        %v832 = vpack.c.b16 %v632, %v624
        %v833 = vpack.c.b16 %v633, %v625
        %v834 = vpack.c.b16 %v642, %v634
        %v835 = vpack.c.b16 %v643, %v635
        %v836 = vpack.c.b16 %v644, %v636
        %v837 = vpack.c.b16 %v645, %v637
        %v838 = vpack.c.b16 %v646, %v638
        %v839 = vpack.c.b16 %v647, %v639
        %v840 = vpack.c.b16 %v648, %v640
        %v841 = vpack.c.b16 %v649, %v641
        %v842 = vpack.c.b16 %v658, %v650
        %v843 = vpack.c.b16 %v659, %v651
        %v844 = vpack.c.b16 %v660, %v652
        %v845 = vpack.c.b16 %v661, %v653
        %v846 = vpack.c.b16 %v662, %v654
        %v847 = vpack.c.b16 %v663, %v655
        %v848 = vpack.c.b16 %v664, %v656
        %v849 = vpack.c.b16 %v665, %v657
        %v850 = vpack.c.b16 %v674, %v666
        %v851 = vpack.c.b16 %v675, %v667
        %v852 = vpack.c.b16 %v676, %v668
        %v853 = vpack.c.b16 %v677, %v669
        %v854 = vpack.c.b16 %v678, %v670
        %v855 = vpack.c.b16 %v679, %v671
        %v856 = vpack.c.b16 %v680, %v672
        %v857 = vpack.c.b16 %v681, %v673
        %v858 = vpack.c.b16 %v690, %v682
        %v859 = vpack.c.b16 %v691, %v683
        %v860 = vpack.c.b16 %v692, %v684
        %v861 = vpack.c.b16 %v693, %v685
        %v862 = vpack.c.b16 %v694, %v686
        %v863 = vpack.c.b16 %v695, %v687
        %v864 = vpack.c.b16 %v696, %v688
        %v865 = vpack.c.b16 %v697, %v689
        %v866 = vpack.c.b16 %v706, %v698
        %v867 = vpack.c.b16 %v707, %v699
        %v868 = vpack.c.b16 %v708, %v700
        %v869 = vpack.c.b16 %v709, %v701
        %v870 = vpack.c.b16 %v710, %v702
        %v871 = vpack.c.b16 %v711, %v703
        %v872 = vpack.c.b16 %v712, %v704
        %v873 = vpack.c.b16 %v713, %v705
        %v874 = vpack.c.b16 %v722, %v714
        %v875 = vpack.c.b16 %v723, %v715
        %v876 = vpack.c.b16 %v724, %v716
        %v877 = vpack.c.b16 %v725, %v717
        %v878 = vpack.c.b16 %v726, %v718
        %v879 = vpack.c.b16 %v727, %v719
        %v880 = vpack.c.b16 %v728, %v720
        %v881 = vpack.c.b16 %v729, %v721
        %v882 = vpack.c.b16 %v738, %v730
        %v883 = vpack.c.b16 %v739, %v731
        %v884 = vpack.c.b16 %v740, %v732
        %v885 = vpack.c.b16 %v741, %v733
        %v886 = vpack.c.b16 %v742, %v734
        %v887 = vpack.c.b16 %v743, %v735
        %v888 = vpack.c.b16 %v744, %v736
        %v889 = vpack.c.b16 %v745, %v737
        %v890 = vpack.c.b16 %v754, %v746
        %v891 = vpack.c.b16 %v755, %v747
        %v892 = vpack.c.b16 %v756, %v748
        %v893 = vpack.c.b16 %v757, %v749
        %v894 = vpack.c.b16 %v758, %v750
        %v895 = vpack.c.b16 %v759, %v751
        %v896 = vpack.c.b16 %v760, %v752
        %v897 = vpack.c.b16 %v761, %v753
        %v898 = vpack.c.b16 %v770, %v762
        %v899 = vpack.c.b16 %v771, %v763
        %v900 = vpack.c.b16 %v772, %v764
        %v901 = vpack.c.b16 %v773, %v765
        %v902 = vpack.c.b16 %v774, %v766
        %v903 = vpack.c.b16 %v775, %v767
        %v904 = vpack.c.b16 %v776, %v768
        %v905 = vpack.c.b16 %v777, %v769
        %1034 = vmatprep.subr.bf16.mxu0 %v779
        %1035 = vmatpush1.bf16.msra.mxu0 %v778
        %1036 = vmatprep.subr.bf16.mxu0 %v787
        %1037 = vmatpush1.bf16.msra.mxu0 %v786
        %1038 = vmatprep.subr.bf16.mxu0 %v795
        %1039 = vmatpush1.bf16.msra.mxu0 %v794
        %1040 = vmatprep.subr.bf16.mxu0 %v803
        %1041 = vmatpush1.bf16.msra.mxu0 %v802
        %1042 = vmatprep.subr.bf16.mxu0 %v811
        %1043 = vmatpush1.bf16.msra.mxu0 %v810
        %1044 = vmatprep.subr.bf16.mxu0 %v819
        %1045 = vmatpush1.bf16.msra.mxu0 %v818
        %1046 = vmatprep.subr.bf16.mxu0 %v827
        %1047 = vmatpush1.bf16.msra.mxu0 %v826
        %1048 = vmatprep.subr.bf16.mxu0 %v835
        %1049 = vmatpush1.bf16.msra.mxu0 %v834
        %1050 = vmatprep.subr.bf16.mxu0 %v843
        %1051 = vmatpush1.bf16.msra.mxu0 %v842
        %1052 = vmatprep.subr.bf16.mxu0 %v851
        %1053 = vmatpush1.bf16.msra.mxu0 %v850
        %1054 = vmatprep.subr.bf16.mxu0 %v859
        %1055 = vmatpush1.bf16.msra.mxu0 %v858
        %1056 = vmatprep.subr.bf16.mxu0 %v867
        %1057 = vmatpush1.bf16.msra.mxu0 %v866
        %1058 = vmatprep.subr.bf16.mxu0 %v875
        %1059 = vmatpush1.bf16.msra.mxu0 %v874
        %1060 = vmatprep.subr.bf16.mxu0 %v883
        %1061 = vmatpush1.bf16.msra.mxu0 %v882
        %1062 = vmatprep.subr.bf16.mxu0 %v891
        %1063 = vmatpush1.bf16.msra.mxu0 %v890
        %1064 = vmatprep.subr.bf16.mxu0 %v899
        %1065 = vmatpush1.bf16.msra.mxu0 %v898
        %1066 = vmatprep.mubr.bf16.mxu0 %v391
        %1067 = vmatmul.mubr.bf16.gmra.mrb[0].mxu0 %v390
        %v1068 = vpop.f32.mrb[0].mxu0
        %v1069 = vadd.f32 0.0, %v1068
        %v1070 = vpop.f32.mrb[0].mxu0
        %v1071 = vadd.f32 0.0, %v1070
        %v1072 = vpop.f32.mrb[0].mxu0
        %v1073 = vpop.f32.mrb[0].mxu0
        %1074 = vdwg.mxu0
        %1075 = vmatprep.subr.bf16.mxu0 %v781
        %1076 = vmatpush1.bf16.msra.mxu0 %v780
        %1077 = vmatprep.subr.bf16.mxu0 %v789
        %1078 = vmatpush1.bf16.msra.mxu0 %v788
        %1079 = vmatprep.subr.bf16.mxu0 %v797
        %1080 = vmatpush1.bf16.msra.mxu0 %v796
        %1081 = vmatprep.subr.bf16.mxu0 %v805
        %1082 = vmatpush1.bf16.msra.mxu0 %v804
        %1083 = vmatprep.subr.bf16.mxu0 %v813
        %1084 = vmatpush1.bf16.msra.mxu0 %v812
        %1085 = vmatprep.subr.bf16.mxu0 %v821
        %1086 = vmatpush1.bf16.msra.mxu0 %v820
        %1087 = vmatprep.subr.bf16.mxu0 %v829
        %1088 = vmatpush1.bf16.msra.mxu0 %v828
        %1089 = vmatprep.subr.bf16.mxu0 %v837
        %1090 = vmatpush1.bf16.msra.mxu0 %v836
        %1091 = vmatprep.subr.bf16.mxu0 %v845
        %1092 = vmatpush1.bf16.msra.mxu0 %v844
        %1093 = vmatprep.subr.bf16.mxu0 %v853
        %1094 = vmatpush1.bf16.msra.mxu0 %v852
        %1095 = vmatprep.subr.bf16.mxu0 %v861
        %1096 = vmatpush1.bf16.msra.mxu0 %v860
        %1097 = vmatprep.subr.bf16.mxu0 %v869
        %1098 = vmatpush1.bf16.msra.mxu0 %v868
        %1099 = vmatprep.subr.bf16.mxu0 %v877
        %1100 = vmatpush1.bf16.msra.mxu0 %v876
        %1101 = vmatprep.subr.bf16.mxu0 %v885
        %1102 = vmatpush1.bf16.msra.mxu0 %v884
        %1103 = vmatprep.subr.bf16.mxu0 %v893
        %1104 = vmatpush1.bf16.msra.mxu0 %v892
        %1105 = vmatprep.subr.bf16.mxu0 %v901
        %1106 = vmatpush1.bf16.msra.mxu0 %v900
        %1107 = vmatprep.mubr.bf16.mxu0 %v391
        %1108 = vmatmul.mubr.bf16.gmra.mrb[0].mxu0 %v390
        %v1109 = vpop.f32.mrb[0].mxu0
        %v1110 = vadd.f32 0.0, %v1109
        %v1111 = vpop.f32.mrb[0].mxu0
        %v1112 = vadd.f32 0.0, %v1111
        %v1113 = vpop.f32.mrb[0].mxu0
        %v1114 = vpop.f32.mrb[0].mxu0
        %1115 = vdwg.mxu0
        %1116 = vmatprep.subr.bf16.mxu0 %v783
        %1117 = vmatpush1.bf16.msra.mxu0 %v782
        %1118 = vmatprep.subr.bf16.mxu0 %v791
        %1119 = vmatpush1.bf16.msra.mxu0 %v790
        %1120 = vmatprep.subr.bf16.mxu0 %v799
        %1121 = vmatpush1.bf16.msra.mxu0 %v798
        %1122 = vmatprep.subr.bf16.mxu0 %v807
        %1123 = vmatpush1.bf16.msra.mxu0 %v806
        %1124 = vmatprep.subr.bf16.mxu0 %v815
        %1125 = vmatpush1.bf16.msra.mxu0 %v814
        %1126 = vmatprep.subr.bf16.mxu0 %v823
        %1127 = vmatpush1.bf16.msra.mxu0 %v822
        %1128 = vmatprep.subr.bf16.mxu0 %v831
        %1129 = vmatpush1.bf16.msra.mxu0 %v830
        %1130 = vmatprep.subr.bf16.mxu0 %v839
        %1131 = vmatpush1.bf16.msra.mxu0 %v838
        %1132 = vmatprep.subr.bf16.mxu0 %v847
        %1133 = vmatpush1.bf16.msra.mxu0 %v846
        %1134 = vmatprep.subr.bf16.mxu0 %v855
        %1135 = vmatpush1.bf16.msra.mxu0 %v854
        %1136 = vmatprep.subr.bf16.mxu0 %v863
        %1137 = vmatpush1.bf16.msra.mxu0 %v862
        %1138 = vmatprep.subr.bf16.mxu0 %v871
        %1139 = vmatpush1.bf16.msra.mxu0 %v870
        %1140 = vmatprep.subr.bf16.mxu0 %v879
        %1141 = vmatpush1.bf16.msra.mxu0 %v878
        %1142 = vmatprep.subr.bf16.mxu0 %v887
        %1143 = vmatpush1.bf16.msra.mxu0 %v886
        %1144 = vmatprep.subr.bf16.mxu0 %v895
        %1145 = vmatpush1.bf16.msra.mxu0 %v894
        %1146 = vmatprep.subr.bf16.mxu0 %v903
        %1147 = vmatpush1.bf16.msra.mxu0 %v902
        %1148 = vmatprep.mubr.bf16.mxu0 %v391
        %1149 = vmatmul.mubr.bf16.gmra.mrb[0].mxu0 %v390
        %v1150 = vpop.f32.mrb[0].mxu0
        %v1151 = vadd.f32 0.0, %v1150
        %v1152 = vpop.f32.mrb[0].mxu0
        %v1153 = vadd.f32 0.0, %v1152
        %v1154 = vpop.f32.mrb[0].mxu0
        %v1155 = vpop.f32.mrb[0].mxu0
        %1156 = vdwg.mxu0
        %1157 = vmatprep.subr.bf16.mxu0 %v785
        %1158 = vmatpush1.bf16.msra.mxu0 %v784
        %1159 = vmatprep.subr.bf16.mxu0 %v793
        %1160 = vmatpush1.bf16.msra.mxu0 %v792
        %1161 = vmatprep.subr.bf16.mxu0 %v801
        %1162 = vmatpush1.bf16.msra.mxu0 %v800
        %1163 = vmatprep.subr.bf16.mxu0 %v809
        %1164 = vmatpush1.bf16.msra.mxu0 %v808
        %1165 = vmatprep.subr.bf16.mxu0 %v817
        %1166 = vmatpush1.bf16.msra.mxu0 %v816
        %1167 = vmatprep.subr.bf16.mxu0 %v825
        %1168 = vmatpush1.bf16.msra.mxu0 %v824
        %1169 = vmatprep.subr.bf16.mxu0 %v833
        %1170 = vmatpush1.bf16.msra.mxu0 %v832
        %1171 = vmatprep.subr.bf16.mxu0 %v841
        %1172 = vmatpush1.bf16.msra.mxu0 %v840
        %1173 = vmatprep.subr.bf16.mxu0 %v849
        %1174 = vmatpush1.bf16.msra.mxu0 %v848
        %1175 = vmatprep.subr.bf16.mxu0 %v857
        %1176 = vmatpush1.bf16.msra.mxu0 %v856
        %1177 = vmatprep.subr.bf16.mxu0 %v865
        %1178 = vmatpush1.bf16.msra.mxu0 %v864
        %1179 = vmatprep.subr.bf16.mxu0 %v873
        %1180 = vmatpush1.bf16.msra.mxu0 %v872
        %1181 = vmatprep.subr.bf16.mxu0 %v881
        %1182 = vmatpush1.bf16.msra.mxu0 %v880
        %1183 = vmatprep.subr.bf16.mxu0 %v889
        %1184 = vmatpush1.bf16.msra.mxu0 %v888
        %1185 = vmatprep.subr.bf16.mxu0 %v897
        %1186 = vmatpush1.bf16.msra.mxu0 %v896
        %1187 = vmatprep.subr.bf16.mxu0 %v905
        %1188 = vmatpush1.bf16.msra.mxu0 %v904
        %1189 = vmatprep.mubr.bf16.mxu0 %v391
        %1190 = vmatmul.mubr.bf16.gmra.mrb[0].mxu0 %v390
        %v1191 = vpop.f32.mrb[0].mxu0
        %v1192 = vadd.f32 0.0, %v1191
        %v1193 = vpop.f32.mrb[0].mxu0
        %v1194 = vadd.f32 0.0, %v1193
        %v1195 = vpop.f32.mrb[0].mxu0
        %v1196 = vpop.f32.mrb[0].mxu0
        %1197 = vdwg.mxu0
        %v1198 = vlaneseq
        %v1199 = vand.u32 %v1198, 127
        %v1200 = vadd.s32 %v1199, 128
        %v1201 = vadd.s32 %v1199, 256
        %v1202 = vadd.s32 %v1199, 384
        %v1203 = vadd.s32 %v1199, 512
        %v1204 = vadd.s32 %v1199, 640
        %v1205 = vadd.s32 %v1199, 768
        %v1206 = vadd.s32 %v1199, 896
        %s1207 = smul.u32 %s18, 1024
        %v1208 = vstv %s1207
        %v1209 = vadd.s32 %v1199, %v1208
        %v1210 = vadd.s32 %v1200, %v1208
        %v1211 = vadd.s32 %v1201, %v1208
        %v1212 = vadd.s32 %v1202, %v1208
        %v1213 = vadd.s32 %v1203, %v1208
        %v1214 = vadd.s32 %v1204, %v1208
        %v1215 = vadd.s32 %v1205, %v1208
        %v1216 = vadd.s32 %v1206, %v1208
        %vm1217 = vcmp.lt.s32.totalorder %v1209, 3000
        %vm1218 = vcmp.lt.s32.totalorder %v1210, 3000
        %vm1219 = vcmp.lt.s32.totalorder %v1211, 3000
        %vm1220 = vcmp.lt.s32.totalorder %v1212, 3000
        %vm1221 = vcmp.lt.s32.totalorder %v1213, 3000
        %vm1222 = vcmp.lt.s32.totalorder %v1214, 3000
        %vm1223 = vcmp.lt.s32.totalorder %v1215, 3000
        %vm1224 = vcmp.lt.s32.totalorder %v1216, 3000
        %v1225 = vsel %vm1217, %v1069, -inf
        %v1226 = vsel %vm1218, %v1071, -inf
        %v1227 = vsel %vm1219, %v1110, -inf
        %v1228 = vsel %vm1220, %v1112, -inf
        %v1229 = vsel %vm1221, %v1151, -inf
        %v1230 = vsel %vm1222, %v1153, -inf
        %v1231 = vsel %vm1223, %v1192, -inf
        %v1232 = vsel %vm1224, %v1194, -inf
        %v1233 = vld [vmem:[#allocation3] sm:$0xff]
        %v1234 = vld [vmem:[#allocation3 + $0x8] sm:$0xff]
        %v1235 = vld [vmem:[#allocation3 + $0x10] sm:$0xff]
        %v1236 = vld [vmem:[#allocation3 + $0x18] sm:$0xff]
        %v1237 = vld [vmem:[#allocation3 + $0x20] sm:$0xff]
        %v1238 = vld [vmem:[#allocation3 + $0x28] sm:$0xff]
        %v1239 = vld [vmem:[#allocation3 + $0x30] sm:$0xff]
        %v1240 = vld [vmem:[#allocation3 + $0x38] sm:$0xff]
        %vm1241 = vcmp.gt.f32.partialorder %v1225, %v1233
        %vm1242 = vcmp.gt.f32.partialorder %v1226, %v1234
        %vm1243 = vcmp.gt.f32.partialorder %v1227, %v1235
        %vm1244 = vcmp.gt.f32.partialorder %v1228, %v1236
        %vm1245 = vcmp.gt.f32.partialorder %v1229, %v1237
        %vm1246 = vcmp.gt.f32.partialorder %v1230, %v1238
        %vm1247 = vcmp.gt.f32.partialorder %v1231, %v1239
        %vm1248 = vcmp.gt.f32.partialorder %v1232, %v1240
        %v1249 = vsel %vm1241, %v1225, %v1233
        %v1250 = vsel %vm1242, %v1226, %v1234
        %v1251 = vsel %vm1243, %v1227, %v1235
        %v1252 = vsel %vm1244, %v1228, %v1236
        %v1253 = vsel %vm1245, %v1229, %v1237
        %v1254 = vsel %vm1246, %v1230, %v1238
        %v1255 = vsel %vm1247, %v1231, %v1239
        %v1256 = vsel %vm1248, %v1232, %v1240
        %1257 = vst [vmem:[#allocation3] sm:$0xff] %v1249
        %1258 = vst [vmem:[#allocation3 + $0x8] sm:$0xff] %v1250
        %1259 = vst [vmem:[#allocation3 + $0x10] sm:$0xff] %v1251
        %1260 = vst [vmem:[#allocation3 + $0x18] sm:$0xff] %v1252
        %1261 = vst [vmem:[#allocation3 + $0x20] sm:$0xff] %v1253
        %1262 = vst [vmem:[#allocation3 + $0x28] sm:$0xff] %v1254
        %1263 = vst [vmem:[#allocation3 + $0x30] sm:$0xff] %v1255
        %1264 = vst [vmem:[#allocation3 + $0x38] sm:$0xff] %v1256
        %v1265 = vld [vmem:[#allocation4] sm:$0xff]
        %v1266 = vld [vmem:[#allocation4 + $0x8] sm:$0xff]
        %v1267 = vld [vmem:[#allocation4 + $0x10] sm:$0xff]
        %v1268 = vld [vmem:[#allocation4 + $0x18] sm:$0xff]
        %v1269 = vld [vmem:[#allocation4 + $0x20] sm:$0xff]
        %v1270 = vld [vmem:[#allocation4 + $0x28] sm:$0xff]
        %v1271 = vld [vmem:[#allocation4 + $0x30] sm:$0xff]
        %v1272 = vld [vmem:[#allocation4 + $0x38] sm:$0xff]
        %v1273 = vsel %vm1241, %v1209, %v1265
        %v1274 = vsel %vm1242, %v1210, %v1266
        %v1275 = vsel %vm1243, %v1211, %v1267
        %v1276 = vsel %vm1244, %v1212, %v1268
        %v1277 = vsel %vm1245, %v1213, %v1269
        %v1278 = vsel %vm1246, %v1214, %v1270
        %v1279 = vsel %vm1247, %v1215, %v1271
        %v1280 = vsel %vm1248, %v1216, %v1272
        %1281 = vst [vmem:[#allocation4] sm:$0xff] %v1273
        %1282 = vst [vmem:[#allocation4 + $0x8] sm:$0xff] %v1274
        %1283 = vst [vmem:[#allocation4 + $0x10] sm:$0xff] %v1275
        %1284 = vst [vmem:[#allocation4 + $0x18] sm:$0xff] %v1276
        %1285 = vst [vmem:[#allocation4 + $0x20] sm:$0xff] %v1277
        %1286 = vst [vmem:[#allocation4 + $0x28] sm:$0xff] %v1278
        %1287 = vst [vmem:[#allocation4 + $0x30] sm:$0xff] %v1279
        %1288 = vst [vmem:[#allocation4 + $0x38] sm:$0xff] %v1280
        %p1289 = scmp.eq.s32.totalorder %s18, 2
        // Predicated region
        $region49: #{lm_head_forward.1} parent=31 // pred_check
          %p1290 = pneg %p1289
        $region50: #{lm_head_forward.1} parent=31 // pred_check_branch
          %1292 = sbr.rel (%p1290) target = $region52
        $region51: #{lm_head_forward.1} parent=31 // pred_region
          %v1293 = vld [vmem:[#allocation3] sm:$0xff]
          %v1294 = vld [vmem:[#allocation3 + $0x8] sm:$0xff]
          %v1295 = vld [vmem:[#allocation3 + $0x10] sm:$0xff]
          %v1296 = vld [vmem:[#allocation3 + $0x18] sm:$0xff]
          %v1297 = vld [vmem:[#allocation3 + $0x20] sm:$0xff]
          %v1298 = vld [vmem:[#allocation3 + $0x28] sm:$0xff]
          %v1299 = vld [vmem:[#allocation3 + $0x30] sm:$0xff]
          %v1300 = vld [vmem:[#allocation3 + $0x38] sm:$0xff]
          %v1301 = vmax.f32 %v1293, %v1297
          %v1302 = vmax.f32 %v1294, %v1298
          %v1303 = vmax.f32 %v1295, %v1299
          %v1304 = vmax.f32 %v1296, %v1300
          %v1305 = vmax.f32 %v1301, %v1302
          %v1306 = vmax.f32 %v1303, %v1304
          %v1307 = vmax.f32 %v1305, %v1306
          %1308 = vmax.xlane.f32.xlu0 %v1307
          %v1309 = vpop.xlane.xlu0 %1308
          %vm1310 = vcmp.eq.f32.partialorder %v1293, %v1309
          %vm1311 = vcmp.eq.f32.partialorder %v1294, %v1309
          %vm1312 = vcmp.eq.f32.partialorder %v1295, %v1309
          %vm1313 = vcmp.eq.f32.partialorder %v1296, %v1309
          %vm1314 = vcmp.eq.f32.partialorder %v1297, %v1309
          %vm1315 = vcmp.eq.f32.partialorder %v1298, %v1309
          %vm1316 = vcmp.eq.f32.partialorder %v1299, %v1309
          %vm1317 = vcmp.eq.f32.partialorder %v1300, %v1309
          %v1318 = vld [vmem:[#allocation4] sm:$0xff]
          %v1319 = vld [vmem:[#allocation4 + $0x8] sm:$0xff]
          %v1320 = vld [vmem:[#allocation4 + $0x10] sm:$0xff]
          %v1321 = vld [vmem:[#allocation4 + $0x18] sm:$0xff]
          %v1322 = vld [vmem:[#allocation4 + $0x20] sm:$0xff]
          %v1323 = vld [vmem:[#allocation4 + $0x28] sm:$0xff]
          %v1324 = vld [vmem:[#allocation4 + $0x30] sm:$0xff]
          %v1325 = vld [vmem:[#allocation4 + $0x38] sm:$0xff]
          %v1326 = vsel %vm1310, %v1318, 1073741824
          %v1327 = vsel %vm1311, %v1319, 1073741824
          %v1328 = vsel %vm1312, %v1320, 1073741824
          %v1329 = vsel %vm1313, %v1321, 1073741824
          %v1330 = vsel %vm1314, %v1322, 1073741824
          %v1331 = vsel %vm1315, %v1323, 1073741824
          %v1332 = vsel %vm1316, %v1324, 1073741824
          %v1333 = vsel %vm1317, %v1325, 1073741824
          %vm1334 = vcmp.lt.s32.totalorder %v1326, %v1330
          %v1335 = vsel %vm1334, %v1326, %v1330
          %vm1336 = vcmp.lt.s32.totalorder %v1327, %v1331
          %v1337 = vsel %vm1336, %v1327, %v1331
          %vm1338 = vcmp.lt.s32.totalorder %v1328, %v1332
          %v1339 = vsel %vm1338, %v1328, %v1332
          %vm1340 = vcmp.lt.s32.totalorder %v1329, %v1333
          %v1341 = vsel %vm1340, %v1329, %v1333
          %vm1342 = vcmp.lt.s32.totalorder %v1335, %v1337
          %v1343 = vsel %vm1342, %v1335, %v1337
          %vm1344 = vcmp.lt.s32.totalorder %v1339, %v1341
          %v1345 = vsel %vm1344, %v1339, %v1341
          %vm1346 = vcmp.lt.s32.totalorder %v1343, %v1345
          %v1347 = vsel %vm1346, %v1343, %v1345
          %v1348 = vand.u32 %v1347, 65535
          %v1349 = vshra.s32 %v1347, 16
          %v1350 = vcvt.s32.f32 %v1348
          %v1351 = vcvt.s32.f32 %v1349
          %1352 = vmin.xlane.f32.xlu0 %v1351
          %v1353 = vpop.xlane.xlu0 %1352
          %vm1354 = vcmp.eq.f32.partialorder %v1351, %v1353
          %v1355 = vsel %vm1354, %v1350, inf
          %1356 = vmin.xlane.f32.xlu0 %v1355
          %v1357 = vpop.xlane.xlu0 %1356
          %v1358 = vcvt.f32.s32 %v1357
          %v1359 = vcvt.f32.s32 %v1353
          %v1360 = vshll.u32 %v1359, 16
          %v1361 = vadd.s32 %v1360, %v1358
          %vm1362 = vcmask 7168
          %1363 = vst.msk [vmem:[%s3] sm:$0xff] %vm1362, %v1361
        $region52: #{lm_head_forward.1} parent=31 // pred_fallthru
          _
        // Predicated region
        $region53: #{lm_head_forward.1} parent=31 // pred_check
          %p1364 = pneg %p99
        $region54: #{lm_head_forward.1} parent=31 // pred_check_branch
          %1366 = sbr.rel (%p1364) target = $region56
        $region55: #{lm_head_forward.1} parent=31 // pred_region
          _
        $region56: #{lm_head_forward.1} parent=31 // pred_fallthru
          _
        // Predicated region
        $region57: #{lm_head_forward.1} parent=31 // pred_check
          %p1367 = pneg %p99
        $region58: #{lm_head_forward.1} parent=31 // pred_check_branch
          %1369 = sbr.rel (%p1367) target = $region60
        $region59: #{lm_head_forward.1} parent=31 // pred_region
          _
        $region60: #{lm_head_forward.1} parent=31 // pred_fallthru
          _
      $region32: #{lm_head_forward.1} parent=5 // pred_fallthru
        _
      %p1370 = scmp.le.s32.totalorder 2, %s13
      // Predicated region
      $region61: #{lm_head_forward.1} parent=5 // pred_check
        %p1371 = pneg %p1370
      $region62: #{lm_head_forward.1} parent=5 // pred_check_branch
        %1373 = sbr.rel (%p1371) target = $region64
      $region63: #{lm_head_forward.1} parent=5 // pred_region
        %s1374 = ssub.s32 %s13, 2
      $region64: #{lm_head_forward.1} parent=5 // pred_fallthru
        _
    $region6: #{lm_head_forward.1} parent=1 // loop_footer
      %s17 = sadd.s32 1, %s13
    $region7: #{lm_head_forward.1} parent=1 // loop_footer_branch
      %12 = sbr.rel target = $region3
    $region8: #{lm_head_forward.1} parent=1 // loop_exit
      _
    %1375 = vsyncpa [#allocation6], 1
    %s1376 = scalar_lea.sflag [#allocation6], 1
    %1377 = vsyncpa %s1376, 1
    %1378 = vsyncpa [#allocation8], 1
    %s1379 = scalar_lea.sflag [#allocation8], 1
    %1380 = vsyncpa %s1379, 1

</llo_original>
